<compile_context>
chip_gen: v7x
topology: tpu7x:2x2x1
jax: 0.10.0
libtpu: 0.0.40
codegen_flags: <defaults>
</compile_context>

<pallas_src>
import math
from functools import partial

import jax
import jax.numpy as jnp
from jax import lax
from jax.experimental import pallas as pl
from jax.experimental.pallas import tpu as pltpu


# --------------------------------------------------------------------------- #
# Generation-aware VMEM budgeting / tile-size helpers
# --------------------------------------------------------------------------- #
def _vmem_capacity_bytes():
    """Physical VMEM per TensorCore; conservative fallback if query fails."""
    try:
        return int(pltpu.get_tpu_info().vmem_capacity_bytes)
    except Exception:
        return 64 * 1024 * 1024  # v7x-sized fallback works everywhere


def _align_down(x, a):
    return max(a, (x // a) * a)


def _pick_tile(length, cap, align):
    """Largest tile <= cap that is a multiple of `align`, or the full length."""
    if length <= cap:
        return length
    return _align_down(cap, align)


def _fit_proj_tile(length, d_model, n_head, d_h, x_bytes, w_bytes, out_bytes,
                   budget_bytes):
    """Pick the stage-1 length tile so its VMEM footprint fits the budget."""
    tl = _pick_tile(length, 1024, 8)

    def footprint(t):
        return (2 * t * d_model * x_bytes            # x blocks, double-buffered
                + 2 * t * n_head * d_h * out_bytes   # out blocks, double-buffered
                + t * n_head * d_h * 4               # f32 accumulator value
                + d_model * n_head * d_h * w_bytes   # resident weights
                + n_head * d_h * 4)                  # bias

    while footprint(tl) > budget_bytes and tl > 8:
        tl = _align_down(tl // 2, 8)
    return tl


def _fit_energy_tiles(len_q, len_k, n_head, d_k, in_bytes, e_bytes,
                      budget_bytes):
    """Pick (tq, tk) so e blocks + QH/KH blocks fit the VMEM budget."""
    tq = _pick_tile(len_q, 1024, 8)
    tk = _pick_tile(len_k, 512, 128)

    def footprint(a, b):
        e_out = 2 * n_head * a * b * e_bytes              # double-buffered e block
        e_tmp = a * b * 4                                  # per-head f32 tile value
        qk_in = 2 * (a + b) * n_head * d_k * in_bytes      # double-buffered inputs
        return e_out + e_tmp + qk_in

    while footprint(tq, tk) > budget_bytes and tq > 512:
        tq = _align_down(tq // 2, 8)
    while footprint(tq, tk) > budget_bytes and tk > 128:
        tk = _align_down(tk // 2, 128)
    while footprint(tq, tk) > budget_bytes and tq > 8:
        tq = _align_down(tq // 2, 8)
    return tq, tk


# --------------------------------------------------------------------------- #
# Stage 1: fused-head linear projection, head-major output
#   y = (x @ W + b) * scale   ->  out[h, b, l, :] = y[:, h*d_h:(h+1)*d_h]
# --------------------------------------------------------------------------- #
def _projection_kernel(x_ref, w_ref, b_ref, out_ref, *, scale, n_head, d_h,
                       compute_dtype):
    x = x_ref[0].astype(compute_dtype)          # (tl, d_model)   bf16 operands
    w = w_ref[...]                              # (d_model, n_head*d_h)
    y = jnp.dot(x, w, preferred_element_type=jnp.float32) + b_ref[...]
    if scale != 1.0:
        y = y * scale
    y = y.astype(out_ref.dtype)
    # Head-split store loop: makes `head` a leading (non-lane) dim of the
    # HBM layout so stage 2 never lane-slices and the wrapper never transposes.
    for h in range(n_head):
        out_ref[h, 0] = y[:, h * d_h:(h + 1) * d_h]


def _project(x, w_t, b, *, n_head, d_h, scale, out_dtype, compute_dtype,
             budget_bytes, vmem_limit):
    sz_b, length, d_model = x.shape
    n_total = n_head * d_h
    tl = _fit_proj_tile(length, d_model, n_head, d_h,
                        x.dtype.itemsize, jnp.dtype(compute_dtype).itemsize,
                        jnp.dtype(out_dtype).itemsize, budget_bytes)
    grid = (sz_b, pl.cdiv(length, tl))

    return pl.pallas_call(
        partial(_projection_kernel, scale=scale, n_head=n_head, d_h=d_h,
                compute_dtype=compute_dtype),
        grid=grid,
        in_specs=[
            pl.BlockSpec((1, tl, d_model), lambda bi, li: (bi, li, 0)),
            pl.BlockSpec((d_model, n_total), lambda bi, li: (0, 0)),
            pl.BlockSpec((1, n_total), lambda bi, li: (0, 0)),
        ],
        out_specs=pl.BlockSpec((n_head, 1, tl, d_h),
                               lambda bi, li: (0, bi, li, 0)),
        out_shape=jax.ShapeDtypeStruct((n_head, sz_b, length, d_h), out_dtype),
        compiler_params=pltpu.CompilerParams(
            dimension_semantics=("parallel", "parallel"),
            vmem_limit_bytes=vmem_limit,
        ),
    )(x, w_t, b)


# --------------------------------------------------------------------------- #
# Stage 2: per-head scaled dot-product energy, tiled over (len_q, len_k)
# --------------------------------------------------------------------------- #
def _energy_kernel(qh_ref, kh_ref, e_ref, *, n_head):
    # Head is a leading dim of the head-major blocks -> indexing it is just a
    # different VMEM base address (no cross-lane relayout in the hot loop).
    for h in range(n_head):
        q_h = qh_ref[h, 0]                      # (tq, d_k), already * 1/sqrt(d_k)
        k_h = kh_ref[h, 0]                      # (tk, d_k)
        e = lax.dot_general(
            q_h, k_h,
            dimension_numbers=(((1,), (1,)), ((), ())),
            preferred_element_type=jnp.float32)          # (tq, tk)
        e_ref[h, 0] = e.astype(e_ref.dtype)


def _energy(qh, kh, *, n_head, d_k, out_dtype, budget_bytes, vmem_limit):
    _, sz_b, len_q, _ = qh.shape
    _, _, len_k, _ = kh.shape
    tq, tk = _fit_energy_tiles(len_q, len_k, n_head, d_k,
                               qh.dtype.itemsize, jnp.dtype(out_dtype).itemsize,
                               budget_bytes)
    grid = (sz_b, pl.cdiv(len_q, tq), pl.cdiv(len_k, tk))

    return pl.pallas_call(
        partial(_energy_kernel, n_head=n_head),
        grid=grid,
        in_specs=[
            # QH block resident across the whole inner k loop (map ignores ki).
            pl.BlockSpec((n_head, 1, tq, d_k), lambda b, qi, ki: (0, b, qi, 0)),
            pl.BlockSpec((n_head, 1, tk, d_k), lambda b, qi, ki: (0, b, ki, 0)),
        ],
        out_specs=pl.BlockSpec((n_head, 1, tq, tk),
                               lambda b, qi, ki: (0, b, qi, ki)),
        out_shape=jax.ShapeDtypeStruct((n_head, sz_b, len_q, len_k), out_dtype),
        compiler_params=pltpu.CompilerParams(
            # Every (b, qi, ki) writes an independent e block: no accumulator,
            # so all axes are parallel (lets v7x's 2 TCs shard the grid).
            dimension_semantics=("parallel", "parallel", "parallel"),
            vmem_limit_bytes=vmem_limit,
        ),
    )(qh, kh)


# --------------------------------------------------------------------------- #
# Public wrapper: MultiheadEnergy.forward (mask=None)
# --------------------------------------------------------------------------- #
def multihead_energy(q, k, v, params, *, n_head, d_k, d_v,
                     compute_dtype=jnp.bfloat16):
    sz_b, len_q, _ = q.shape
    _, len_k, _ = k.shape
    _, len_v, _ = v.shape

    cap = _vmem_capacity_bytes()
    budget_bytes = cap // 4          # ~32 MiB on v5e/v6e (128 MiB), ~16 MiB on v7x (64 MiB)
    vmem_limit = (cap * 3) // 4      # scoped limit well under physical VMEM

    # nn.Linear: y = x @ W^T + b.  Weights pre-cast to the MXU-native compute
    # dtype once in the wrapper (halves weight DMA); biases stay f32 and are
    # added to the f32 accumulator.
    wq_t = params["w_qs_w"].T.astype(compute_dtype)     # (d_model, n_head*d_k)
    wk_t = params["w_ks_w"].T.astype(compute_dtype)
    wv_t = params["w_vs_w"].T.astype(compute_dtype)     # (d_model, n_head*d_v)
    bq = params["w_qs_b"].reshape(1, n_head * d_k).astype(jnp.float32)
    bk = params["w_ks_b"].reshape(1, n_head * d_k).astype(jnp.float32)
    bv = params["w_vs_b"].reshape(1, n_head * d_v).astype(jnp.float32)

    inv_temp = 1.0 / math.sqrt(d_k)

    # Stage 1: head-major projections; 1/sqrt(d_k) folded into QH.
    # QH/KH are intermediates -> store in compute_dtype (bf16 default);
    # VH is a module output -> keep the input dtype.
    qh = _project(q, wq_t, bq, n_head=n_head, d_h=d_k, scale=inv_temp,
                  out_dtype=compute_dtype, compute_dtype=compute_dtype,
                  budget_bytes=budget_bytes, vmem_limit=vmem_limit)
    kh = _project(k, wk_t, bk, n_head=n_head, d_h=d_k, scale=1.0,
                  out_dtype=compute_dtype, compute_dtype=compute_dtype,
                  budget_bytes=budget_bytes, vmem_limit=vmem_limit)
    vh = _project(v, wv_t, bv, n_head=n_head, d_h=d_v, scale=1.0,
                  out_dtype=q.dtype, compute_dtype=compute_dtype,
                  budget_bytes=budget_bytes, vmem_limit=vmem_limit)

    # Stage 2: per-head energy (f32, matching the module output dtype).
    e4 = _energy(qh, kh, n_head=n_head, d_k=d_k, out_dtype=jnp.float32,
                 budget_bytes=budget_bytes, vmem_limit=vmem_limit)

    # Head-major layouts make permute(2,0,1,3).view(-1, ...) a free reshape.
    e = e4.reshape(n_head * sz_b, len_q, len_k)
    v_out = vh.reshape(n_head * sz_b, len_v, d_v)
    return e, v_out


# --------------------------------------------------------------------------- #
# Pure-JAX reference mirroring the PyTorch forward (mask=None)
# --------------------------------------------------------------------------- #
def _reference(q, k, v, params, *, n_head, d_k, d_v):
    sz_b, len_q, _ = q.shape
    len_k = k.shape[1]
    len_v = v.shape[1]

    def lin(x, w, b):
        return x @ w.T + b

    qp = lin(q, params["w_qs_w"], params["w_qs_b"]).reshape(sz_b, len_q, n_head, d_k)
    kp = lin(k, params["w_ks_w"], params["w_ks_b"]).reshape(sz_b, len_k, n_head, d_k)
    vp = lin(v, params["w_vs_w"], params["w_vs_b"]).reshape(sz_b, len_v, n_head, d_v)

    qp = jnp.transpose(qp, (2, 0, 1, 3)).reshape(-1, len_q, d_k)
    kp = jnp.transpose(kp, (2, 0, 1, 3)).reshape(-1, len_k, d_k)
    vp = jnp.transpose(vp, (2, 0, 1, 3)).reshape(-1, len_v, d_v)

    e = jnp.einsum("bqd,bkd->bqk", qp, kp) / math.sqrt(d_k)
    return e, vp


if __name__ == "__main__":
    # Small deterministic config (len_q != len_k to exercise distinct tiles).
    n_head, d_model, d_k, d_v = 2, 32, 16, 16
    sz_b, len_q, len_k, len_v = 2, 16, 24, 24

    key = jax.random.PRNGKey(0)
    ks = jax.random.split(key, 9)

    q = jax.random.normal(ks[0], (sz_b, len_q, d_model), jnp.float32)
    k = jax.random.normal(ks[1], (sz_b, len_k, d_model), jnp.float32)
    v = jax.random.normal(ks[2], (sz_b, len_v, d_model), jnp.float32)

    # nn.Linear weights: (out_features, in_features); biases: (out_features,)
    params = {
        "w_qs_w": jax.random.normal(ks[3], (n_head * d_k, d_model), jnp.float32) * 0.1,
        "w_qs_b": jax.random.normal(ks[4], (n_head * d_k,), jnp.float32) * 0.1,
        "w_ks_w": jax.random.normal(ks[5], (n_head * d_k, d_model), jnp.float32) * 0.1,
        "w_ks_b": jax.random.normal(ks[6], (n_head * d_k,), jnp.float32) * 0.1,
        "w_vs_w": jax.random.normal(ks[7], (n_head * d_v, d_model), jnp.float32) * 0.1,
        "w_vs_b": jax.random.normal(ks[8], (n_head * d_v,), jnp.float32) * 0.1,
    }

    e_ref, v_ref = _reference(q, k, v, params, n_head=n_head, d_k=d_k, d_v=d_v)

    # Exact-precision path (f32 operands end-to-end) -> tight tolerance.
    e32, v32 = multihead_energy(q, k, v, params, n_head=n_head, d_k=d_k, d_v=d_v,
                                compute_dtype=jnp.float32)
    jax.block_until_ready((e32, v32))
    assert e32.shape == (n_head * sz_b, len_q, len_k)
    assert v32.shape == (n_head * sz_b, len_v, d_v)
    assert jnp.allclose(e32, e_ref, atol=1e-5, rtol=1e-5)
    assert jnp.allclose(v32, v_ref, atol=1e-5, rtol=1e-5)

    # Default fast path (bf16 matmul operands / intermediates, f32 accumulation)
    # -> bf16-rounding tolerance.
    e_bf, v_bf = multihead_energy(q, k, v, params, n_head=n_head, d_k=d_k, d_v=d_v)
    jax.block_until_ready((e_bf, v_bf))
    assert e_bf.shape == (n_head * sz_b, len_q, len_k)
    assert v_bf.shape == (n_head * sz_b, len_v, d_v)
    assert jnp.allclose(e_bf, e_ref, atol=5e-2, rtol=5e-2)
    assert jnp.allclose(v_bf, v_ref, atol=5e-2, rtol=5e-2)

    print("KERNEL_OK")
</pallas_src>

<mosaic_0001>
module attributes {stable_mosaic.version = 11 : i64} {
  func.func @_projection_kernel(%arg0: i32, %arg1: i32, %arg2: memref<1x16x32xf32, #tpu.memory_space<vmem>>, %arg3: memref<32x32xf32, #tpu.memory_space<vmem>>, %arg4: memref<1x32xf32, #tpu.memory_space<vmem>>, %arg5: memref<2x1x16x16xf32, #tpu.memory_space<vmem>>) attributes {dimension_semantics = [#tpu.dimension_semantics<parallel>, #tpu.dimension_semantics<parallel>], iteration_bounds = array<i64: 2, 1>, scalar_prefetch = 0 : i64, scratch_operands = 0 : i64, tpu.core_type = #tpu.core_type<tc>, window_params = [{transform_indices = @transform_0, window_bounds = array<i64: 1, 16, 32>}, {pipeline_mode = #tpu.pipeline_mode<synchronous>, transform_indices = @transform_1, window_bounds = array<i64: 32, 32>}, {pipeline_mode = #tpu.pipeline_mode<synchronous>, transform_indices = @transform_2, window_bounds = array<i64: 1, 32>}, {transform_indices = @transform_3, window_bounds = array<i64: 2, 1, 16, 16>}]} {
    %c0 = arith.constant 0 : index
    %c0_0 = arith.constant 0 : index
    %c0_1 = arith.constant 0 : index
    %0 = vector.load %arg2[%c0, %c0_0, %c0_1] : memref<1x16x32xf32, #tpu.memory_space<vmem>>, vector<1x16x32xf32>
    %1 = vector.shape_cast %0 : vector<1x16x32xf32> to vector<16x32xf32>
    %c0_2 = arith.constant 0 : index
    %c0_3 = arith.constant 0 : index
    %2 = vector.load %arg3[%c0_2, %c0_3] : memref<32x32xf32, #tpu.memory_space<vmem>>, vector<32x32xf32>
    %cst = arith.constant dense<0.000000e+00> : vector<16x32xf32>
    %3 = tpu.matmul %1, %2, %cst {dimension_numbers = #tpu.dot_dimension_numbers<[1], [0], [0], [1], [0, 0, 1, 1], [], []>} : vector<16x32xf32>, vector<32x32xf32>, vector<16x32xf32> -> vector<16x32xf32>
    %c0_4 = arith.constant 0 : index
    %c0_5 = arith.constant 0 : index
    %4 = vector.load %arg4[%c0_4, %c0_5] : memref<1x32xf32, #tpu.memory_space<vmem>>, vector<1x32xf32>
    %5 = vector.broadcast %4 : vector<1x32xf32> to vector<16x32xf32>
    %6 = arith.addf %3, %5 : vector<16x32xf32>
    %cst_6 = arith.constant 2.500000e-01 : f32
    %7 = vector.broadcast %cst_6 : f32 to vector<16x32xf32>
    %8 = arith.mulf %6, %7 : vector<16x32xf32>
    %9 = vector.extract_strided_slice %8 {offsets = [0, 0], sizes = [16, 16], strides = [1, 1]} : vector<16x32xf32> to vector<16x16xf32>
    %c0_7 = arith.constant 0 : index
    %c0_8 = arith.constant 0 : index
    %c0_9 = arith.constant 0 : index
    %c0_10 = arith.constant 0 : index
    %10 = vector.load %arg5[%c0_7, %c0_8, %c0_9, %c0_10] : memref<2x1x16x16xf32, #tpu.memory_space<vmem>>, vector<1x1x16x16xf32>
    %11 = vector.shape_cast %10 : vector<1x1x16x16xf32> to vector<16x16xf32>
    %12 = vector.shape_cast %9 : vector<16x16xf32> to vector<1x1x16x16xf32>
    tpu.vector_store %arg5[%c0_7, %c0_8, %c0_9, %c0_10], %12 {strides = array<i32>} : memref<2x1x16x16xf32, #tpu.memory_space<vmem>>, vector<1x1x16x16xf32>,
    %13 = vector.extract_strided_slice %8 {offsets = [0, 16], sizes = [16, 16], strides = [1, 1]} : vector<16x32xf32> to vector<16x16xf32>
    %c1 = arith.constant 1 : index
    %c0_11 = arith.constant 0 : index
    %c0_12 = arith.constant 0 : index
    %c0_13 = arith.constant 0 : index
    %14 = vector.load %arg5[%c1, %c0_11, %c0_12, %c0_13] : memref<2x1x16x16xf32, #tpu.memory_space<vmem>>, vector<1x1x16x16xf32>
    %15 = vector.shape_cast %14 : vector<1x1x16x16xf32> to vector<16x16xf32>
    %16 = vector.shape_cast %13 : vector<16x16xf32> to vector<1x1x16x16xf32>
    tpu.vector_store %arg5[%c1, %c0_11, %c0_12, %c0_13], %16 {strides = array<i32>} : memref<2x1x16x16xf32, #tpu.memory_space<vmem>>, vector<1x1x16x16xf32>,
    return
  }
  func.func @transform_0(%arg0: i32, %arg1: i32) -> (i32, i32, i32) {
    %c0_i32 = arith.constant 0 : i32
    %c0_i32_0 = arith.constant 0 : i32
    return %arg0, %arg1, %c0_i32 : i32, i32, i32
  }
  func.func @transform_1(%arg0: i32, %arg1: i32) -> (i32, i32) {
    %c0_i32 = arith.constant 0 : i32
    %c0_i32_0 = arith.constant 0 : i32
    %c0_i32_1 = arith.constant 0 : i32
    return %c0_i32, %c0_i32_0 : i32, i32
  }
  func.func @transform_2(%arg0: i32, %arg1: i32) -> (i32, i32) {
    %c0_i32 = arith.constant 0 : i32
    %c0_i32_0 = arith.constant 0 : i32
    %c0_i32_1 = arith.constant 0 : i32
    return %c0_i32, %c0_i32_0 : i32, i32
  }
  func.func @transform_3(%arg0: i32, %arg1: i32) -> (i32, i32, i32, i32) {
    %c0_i32 = arith.constant 0 : i32
    %c0_i32_0 = arith.constant 0 : i32
    %c0_i32_1 = arith.constant 0 : i32
    return %c0_i32, %arg0, %arg1, %c0_i32_0 : i32, i32, i32, i32
  }
}

</mosaic_0001>

<llo_original>
// kernel: tpu_custom_call.1
$region0: #{tpu_custom_call.1}
  #allocation0 [shape = 'u32[]', space=smem, size = 0x4, offset = 0x4, fixed_abs, tag = 'smem constant byte address 0x4 - core index']
  #allocation1 [shape = 'u32[144,128]{1,0:T(1,128)}', space=vmem, size = 0x12000, scoped, tag = 'internal scratch']
  #allocation8 [shape = 's32[]', space=sflag, size = 0x4, offset = 0, fixed_abs, tag = 'sflag constant byte address 0x0 - dummy sync flag']
  %s0 = inlined_call_operand.hbm [shape: f32[2,16,32], index: 0, kind: input, shape index: {}]
  %s1 = inlined_call_operand.hbm [shape: f32[32,32], index: 1, kind: input, shape index: {}]
  %s2 = inlined_call_operand.vmem [shape: f32[1,32], index: 2, kind: input, shape index: {}]
  %s3 = inlined_call_operand.hbm [shape: f32[2,2,16,16], index: 3, kind: output, shape index: {}]
  %s4 = sld [smem:[#allocation0]]
  $region53: #{tpu_custom_call.1} parent=0
    _
  %s6 = ssub.s32 1, %s4
  %s7 = scalar_select 0, %s6, %s4
  $region1: #{tpu_custom_call.1} parent=0
    #allocation2 [shape = 'u8[16384]{0}', space=vmem, size = 0x4000, scoped, tag = 'input window, operand 0']
    #allocation3 [shape = 's32[2]{0}', space=sflag, size = 0x8, scoped, tag = 'scoped memory for tpu_custom_call.1']
    #allocation4 [shape = 's32[2]{0}', space=sflag, size = 0x8, scoped, tag = 'scoped memory for tpu_custom_call.1']
    #allocation5 [shape = 'u8[16384]{0}', space=vmem, size = 0x4000, scoped, tag = 'input window, operand 1, single buffered']
    #allocation6 [shape = 's32[1]{0}', space=sflag, size = 0x4, scoped, tag = 'scoped memory for tpu_custom_call.1']
    #allocation7 [shape = 'u8[32768]{0}', space=vmem, size = 0x8000, scoped, tag = 'output window, operand 0']
    %8 = vsyncpa [#allocation3], 0
    %s9 = scalar_lea.sflag [#allocation3], 1
    %10 = vsyncpa %s9, 0
    %11 = vsyncpa [#allocation6], 0
    %12 = vsyncpa [#allocation4], 0
    %s13 = scalar_lea.sflag [#allocation4], 1
    %14 = vsyncpa %s13, 0
    loop: start=0, step=1, limit=4
    $region2: #{tpu_custom_call.1} parent=1 // loop_pre_header
      _
    $region3: #{tpu_custom_call.1} parent=1 // loop_header
      %s16 = sphi 0, %s20
      %p17 = scmp.ge.s32.totalorder %s16, 4
      %s23 = sphi 0, %s35
      %s24 = sphi 0, %s31
      %s25 = sphi 0, %s23
      %s26 = sphi 0, %s24
      %s27 = sphi 0, %s25
      %s28 = sphi 0, %s26
      %s40 = sphi 0, %s42
      %s43 = sphi 0, %s40
      %s44 = sphi 0, %s43
      %s60 = sphi 0, %s44
      %s64 = sphi 0, %s64
      %s66 = sphi 0, %s64
      %s67 = sphi 0, %s66
      %s81 = sphi 0, %s67
      %s85 = sphi 0, %s85
      %s87 = sphi 0, %s85
      %s88 = sphi 0, %s87
      %s102 = sphi 0, %s88
      %s110 = sphi 0, %s112
      %s113 = sphi 0, %s110
      %s114 = sphi 0, %s113
      %s130 = sphi 0, %s114
    $region4: #{tpu_custom_call.1} parent=1 // loop_header_branch
      %19 = sbr.rel (%p17) target = $region8
    $region5: #{tpu_custom_call.1} parent=1 // loop_body
      %s21 = ssub.s32 %s16, 1
      %s22 = ssub.s32 %s16, 2
      %s29 = sadd.s32 1, %s24
      %p30 = scmp.ge.s32.totalorder %s29, 1
      %s31 = scalar_select %p30, 0, %s29
      %s32 = sadd.s32 1, %s23
      %s33 = scalar_select %p30, %s32, %s23
      %p34 = scmp.ge.s32.totalorder %s33, 2
      %s35 = scalar_select %p34, 0, %s33
      %s36 = ssub.s32 %s23, %s35
      %s37 = ssub.s32 %s24, %s31
      %s38 = sor.u32 %s36, %s37
      %p39 = scmp.eq.s32.totalorder %s38, 0
      %s41 = sadd.s32 %s40, 1
      %s42 = scalar_select %p39, %s40, %s41
      %p45 = pneg %p39
      %p46 = scmp.eq.s32.totalorder %s16, 1
      %p47 = por %p45, %p46
      %p48 = scmp.ne.s32.totalorder %s40, %s43
      %p49 = scmp.eq.s32.totalorder %s16, 0
      %p50 = por %p48, %p49
      %p51 = scmp.ne.s32.totalorder %s40, %s43
      %p52 = scmp.eq.s32.totalorder %s21, 1
      %p53 = por %p51, %p52
      %p54 = scmp.ne.s32.totalorder %s43, %s44
      %p55 = scmp.eq.s32.totalorder %s21, 0
      %p56 = por %p54, %p55
      %p57 = scmp.ne.s32.totalorder %s43, %s44
      %p58 = scmp.eq.s32.totalorder %s22, 1
      %p59 = por %p57, %p58
      %p61 = scmp.ne.s32.totalorder %s44, %s60
      %p62 = scmp.eq.s32.totalorder %s22, 0
      %p63 = por %p61, %p62
      %s65 = sadd.s32 %s64, 1
      %p68 = scmp.eq.s32.totalorder %s16, 1
      %p69 = scmp.ne.s32.totalorder %s64, %s66
      %p70 = scmp.eq.s32.totalorder %s16, 0
      %p71 = por %p69, %p70
      %p72 = scmp.ne.s32.totalorder %s64, %s66
      %p73 = scmp.eq.s32.totalorder %s21, 1
      %p74 = por %p72, %p73
      %p75 = scmp.ne.s32.totalorder %s66, %s67
      %p76 = scmp.eq.s32.totalorder %s21, 0
      %p77 = por %p75, %p76
      %p78 = scmp.ne.s32.totalorder %s66, %s67
      %p79 = scmp.eq.s32.totalorder %s22, 1
      %p80 = por %p78, %p79
      %p82 = scmp.ne.s32.totalorder %s67, %s81
      %p83 = scmp.eq.s32.totalorder %s22, 0
      %p84 = por %p82, %p83
      %s86 = sadd.s32 %s85, 1
      %p89 = scmp.eq.s32.totalorder %s16, 1
      %p90 = scmp.ne.s32.totalorder %s85, %s87
      %p91 = scmp.eq.s32.totalorder %s16, 0
      %p92 = por %p90, %p91
      %p93 = scmp.ne.s32.totalorder %s85, %s87
      %p94 = scmp.eq.s32.totalorder %s21, 1
      %p95 = por %p93, %p94
      %p96 = scmp.ne.s32.totalorder %s87, %s88
      %p97 = scmp.eq.s32.totalorder %s21, 0
      %p98 = por %p96, %p97
      %p99 = scmp.ne.s32.totalorder %s87, %s88
      %p100 = scmp.eq.s32.totalorder %s22, 1
      %p101 = por %p99, %p100
      %p103 = scmp.ne.s32.totalorder %s88, %s102
      %p104 = scmp.eq.s32.totalorder %s22, 0
      %p105 = por %p103, %p104
      %s106 = ssub.s32 %s23, %s35
      %s107 = ssub.s32 %s24, %s31
      %s108 = sor.u32 %s106, %s107
      %p109 = scmp.eq.s32.totalorder %s108, 0
      %s111 = sadd.s32 %s110, 1
      %s112 = scalar_select %p109, %s110, %s111
      %p115 = pneg %p109
      %p116 = scmp.eq.s32.totalorder %s16, 1
      %p117 = por %p115, %p116
      %p118 = scmp.ne.s32.totalorder %s110, %s113
      %p119 = scmp.eq.s32.totalorder %s16, 0
      %p120 = por %p118, %p119
      %p121 = scmp.ne.s32.totalorder %s110, %s113
      %p122 = scmp.eq.s32.totalorder %s21, 1
      %p123 = por %p121, %p122
      %p124 = scmp.ne.s32.totalorder %s113, %s114
      %p125 = scmp.eq.s32.totalorder %s21, 0
      %p126 = por %p124, %p125
      %p127 = scmp.ne.s32.totalorder %s113, %s114
      %p128 = scmp.eq.s32.totalorder %s22, 1
      %p129 = por %p127, %p128
      %p131 = scmp.ne.s32.totalorder %s114, %s130
      %p132 = scmp.eq.s32.totalorder %s22, 0
      %p133 = por %p131, %p132
      %p134 = scmp.le.s32.totalorder 1, %s16
      %p135 = scmp.lt.s32.totalorder %s16, 3
      %p136 = pnand %p134, %p135
      %p137 = pneg %p136
      // Predicated region
      $region9: #{tpu_custom_call.1} parent=5 // pred_check
        _
      $region10: #{tpu_custom_call.1} parent=5 // pred_check_branch
        %139 = sbr.rel (%p136) target = $region12
      $region11: #{tpu_custom_call.1} parent=5 // pred_region
        %s140 = ssub.s32 %s16, 1
        // Predicated region
        $region13: #{tpu_custom_call.1} parent=11 // pred_check
          %p141 = pneg %p77
        $region14: #{tpu_custom_call.1} parent=11 // pred_check_branch
          %143 = sbr.rel (%p141) target = $region16
        $region15: #{tpu_custom_call.1} parent=11 // pred_region
          %s145 = ssub.s32 512, 512
          %146 = vsyncadd [#allocation6], %s145
          %s147 = sshll.u32 [#allocation5], 4
          %s148 = int_to_ptr.vmem [resolvable:$true] %s147
          %153 = dma.hbm_to_vmem [thread:$0]  %s1, 512, %s148, [#allocation6], 128, 128, 8
        $region16: #{tpu_custom_call.1} parent=11 // pred_fallthru
          _
        // Predicated region
        $region17: #{tpu_custom_call.1} parent=11 // pred_check
          %p154 = pneg %p98
        $region18: #{tpu_custom_call.1} parent=11 // pred_check_branch
          %156 = sbr.rel (%p154) target = $region20
        $region19: #{tpu_custom_call.1} parent=11 // pred_region
          _
        $region20: #{tpu_custom_call.1} parent=11 // pred_fallthru
          _
      $region12: #{tpu_custom_call.1} parent=5 // pred_fallthru
        _
      %p157 = scmp.lt.s32.totalorder %s16, 2
      // Predicated region
      $region21: #{tpu_custom_call.1} parent=5 // pred_check
        %p158 = pneg %p157
      $region22: #{tpu_custom_call.1} parent=5 // pred_check_branch
        %160 = sbr.rel (%p158) target = $region24
      $region23: #{tpu_custom_call.1} parent=5 // pred_region
        // Predicated region
        $region25: #{tpu_custom_call.1} parent=23 // pred_check
          %p161 = pneg %p50
        $region26: #{tpu_custom_call.1} parent=23 // pred_check_branch
          %163 = sbr.rel (%p161) target = $region28
        $region27: #{tpu_custom_call.1} parent=23 // pred_region
          %s164 = sand.u32 %s40, 1
          %s165 = scalar_lea.sflag [#allocation3], %s164
          %s166 = sand.u32 %s40, 1
          %s167 = smul.addr %s166, 16
          %s168 = scalar_lea.vmem [#allocation2], %s167
          %s169 = smul.u32 2, %s24
          %s171 = ssub.s32 256, 256
          %172 = vsyncadd %s165, %s171
          %s173 = smul.addr %s23, 2
          %s174 = sadd.s32 %s169, %s173
          %s175 = smul.addr %s174, 128
          %s176 = scalar_lea.hbm %s0, %s175
          %s177 = sshll.u32 %s168, 4
          %s178 = int_to_ptr.vmem [resolvable:$true] %s177
          %183 = dma.hbm_to_vmem [thread:$0]  %s176, 256, %s178, %s165, 128, 128, 8
        $region28: #{tpu_custom_call.1} parent=23 // pred_fallthru
          _
      $region24: #{tpu_custom_call.1} parent=5 // pred_fallthru
        _
      %p184 = scmp.le.s32.totalorder 1, %s16
      %p185 = scmp.lt.s32.totalorder %s16, 3
      %p186 = pnand %p184, %p185
      %p187 = pneg %p186
      // Predicated region
      $region29: #{tpu_custom_call.1} parent=5 // pred_check
        _
      $region30: #{tpu_custom_call.1} parent=5 // pred_check_branch
        %189 = sbr.rel (%p186) target = $region32
      $region31: #{tpu_custom_call.1} parent=5 // pred_region
        %s190 = ssub.s32 %s16, 1
        %s191 = sand.u32 %s43, 1
        %s192 = scalar_lea.sflag [#allocation3], %s191
        %s193 = sand.u32 %s43, 1
        %s194 = smul.addr %s193, 16
        %s195 = scalar_lea.vmem [#allocation2], %s194
        // Predicated region
        $region33: #{tpu_custom_call.1} parent=31 // pred_check
          %p196 = pneg %p56
        $region34: #{tpu_custom_call.1} parent=31 // pred_check_branch
          %198 = sbr.rel (%p196) target = $region36
        $region35: #{tpu_custom_call.1} parent=31 // pred_region
          %199 = dma.done %s192, 256
        $region36: #{tpu_custom_call.1} parent=31 // pred_fallthru
          _
        // Predicated region
        $region37: #{tpu_custom_call.1} parent=31 // pred_check
          %p200 = pneg %p77
        $region38: #{tpu_custom_call.1} parent=31 // pred_check_branch
          %202 = sbr.rel (%p200) target = $region40
        $region39: #{tpu_custom_call.1} parent=31 // pred_region
          %203 = dma.done [#allocation6], 512
        $region40: #{tpu_custom_call.1} parent=31 // pred_fallthru
          _
        %s204 = sand.u32 %s43, 1
        %s205 = scalar_lea.sflag [#allocation3], %s204
        %s206 = sand.u32 %s43, 1
        %s207 = smul.addr %s206, 16
        %s208 = scalar_lea.vmem [#allocation2], %s207
        %p209 = pneg %p56
        %p210 = pneg %p53
        %p211 = pneg %p77
        %p212 = pneg %p74
        %p213 = pneg %p98
        %p214 = pneg %p95
        %p215 = pneg %p126
        %p216 = pneg %p123
        %s217 = sand.u32 %s113, 1
        %s218 = scalar_lea.sflag [#allocation4], %s217
        %s219 = sand.u32 %s113, 1
        %s220 = smul.addr %s219, 32
        %s221 = scalar_lea.vmem [#allocation7], %s220
        %s222 = smul.u32 2, %s26
        %s223 = smul.u32 2, %s26
        %v224 = vld [vmem:[%s195] sm:$0xff]
        %v225 = vld [vmem:[%s195 + $0x8] sm:$0xff]
        %v226 = vld [vmem:[#allocation5] sm:$0xff]
        %v227 = vld [vmem:[#allocation5 + $0x8] sm:$0xff]
        %v228 = vld [vmem:[#allocation5 + $0x10] sm:$0xff]
        %v229 = vld [vmem:[#allocation5 + $0x18] sm:$0xff]
        %v230 = vld [vmem:[%s2] sm:$0x1]
        %v232 = vlaneseq
        %v233 = vshrl.u32 %v232, 7
        %v234 = vsub.s32 0, %v233
        %v235 = vrot.slane %v230, %v234
        %vm237 = vcmask 261120
        %v239 = vsel %vm237, %v224, 0
        %v242 = vsel %vm237, %v225, 0
        %244 = vmatprep.subr.mxu0 0.0
        %245 = vmatpush1.msra.mxu0 %v226
        %246 = vmatprep.subr.mxu0 0.0
        %247 = vmatpush1.msra.mxu0 %v227
        %248 = vmatprep.subr.mxu0 0.0
        %249 = vmatpush1.msra.mxu0 %v228
        %250 = vmatprep.subr.mxu0 0.0
        %251 = vmatpush1.msra.mxu0 %v229
        %252 = vmatprep.subr.mxu0 0.0
        %253 = vmatpush1.msra.mxu0 0.0
        %254 = vmatprep.subr.mxu0 0.0
        %255 = vmatpush1.msra.mxu0 0.0
        %256 = vmatprep.subr.mxu0 0.0
        %257 = vmatpush1.msra.mxu0 0.0
        %258 = vmatprep.subr.mxu0 0.0
        %259 = vmatpush1.msra.mxu0 0.0
        %260 = vmatprep.subr.mxu0 0.0
        %261 = vmatpush1.msra.mxu0 0.0
        %262 = vmatprep.subr.mxu0 0.0
        %263 = vmatpush1.msra.mxu0 0.0
        %264 = vmatprep.subr.mxu0 0.0
        %265 = vmatpush1.msra.mxu0 0.0
        %266 = vmatprep.subr.mxu0 0.0
        %267 = vmatpush1.msra.mxu0 0.0
        %268 = vmatprep.subr.mxu0 0.0
        %269 = vmatpush1.msra.mxu0 0.0
        %270 = vmatprep.subr.mxu0 0.0
        %271 = vmatpush1.msra.mxu0 0.0
        %272 = vmatprep.subr.mxu0 0.0
        %273 = vmatpush1.msra.mxu0 0.0
        %274 = vmatprep.subr.mxu0 0.0
        %275 = vmatpush1.msra.mxu0 0.0
        %276 = vmatprep.subr.mxu0 0.0
        %277 = vmatpush1.msra.mxu0 0.0
        %278 = vmatprep.subr.mxu0 0.0
        %279 = vmatpush1.msra.mxu0 0.0
        %280 = vmatprep.subr.mxu0 0.0
        %281 = vmatpush1.msra.mxu0 0.0
        %282 = vmatprep.subr.mxu0 0.0
        %283 = vmatpush1.msra.mxu0 0.0
        %284 = vmatprep.subr.mxu0 0.0
        %285 = vmatpush1.msra.mxu0 0.0
        %286 = vmatprep.subr.mxu0 0.0
        %287 = vmatpush1.msra.mxu0 0.0
        %288 = vmatprep.subr.mxu0 0.0
        %289 = vmatpush1.msra.mxu0 0.0
        %290 = vmatprep.subr.mxu0 0.0
        %291 = vmatpush1.msra.mxu0 0.0
        %292 = vmatprep.subr.mxu0 0.0
        %293 = vmatpush1.msra.mxu0 0.0
        %294 = vmatprep.subr.mxu0 0.0
        %295 = vmatpush1.msra.mxu0 0.0
        %296 = vmatprep.subr.mxu0 0.0
        %297 = vmatpush1.msra.mxu0 0.0
        %298 = vmatprep.subr.mxu0 0.0
        %299 = vmatpush1.msra.mxu0 0.0
        %300 = vmatprep.subr.mxu0 0.0
        %301 = vmatpush1.msra.mxu0 0.0
        %302 = vmatprep.subr.mxu0 0.0
        %303 = vmatpush1.msra.mxu0 0.0
        %304 = vmatprep.subr.mxu0 0.0
        %305 = vmatpush1.msra.mxu0 0.0
        %306 = vmatprep.subr.mxu0 0.0
        %307 = vmatpush1.msra.mxu0 0.0
        %308 = vmatprep.mubr.f32.mxu0 0.0
        %309 = vmatmul.mubr.f32.gmra.mrb[0].mxu0 %v239
        %v310 = vpop.f32.mrb[0].mxu0
        %v311 = vadd.f32 %v235, %v310
        %v312 = vpop.f32.mrb[0].mxu0
        %313 = vmatprep.mubr.f32.mxu0 0.0
        %314 = vmatmul.mubr.f32.gmra.mrb[0].mxu0 %v242
        %v315 = vpop.f32.mrb[0].mxu0
        %v316 = vadd.f32 %v235, %v315
        %v317 = vpop.f32.mrb[0].mxu0
        %318 = vdwg.mxu0
        %v319 = vmul.f32 %v311, 0.25
        %v320 = vmul.f32 %v316, 0.25
        %vm321 = vcmask 130048
        %322 = vst.msk [vmem:[%s221] sm:$0xff] %vm321, %v319
        %323 = vst.msk [vmem:[%s221 + $0x8] sm:$0xff] %vm321, %v320
        %326 = vrot.lane.b32.xlu0 %v319, 112
        %v327 = vpop.permute.xlu0 %326
        %328 = vrot.lane.b32.xlu0 %v320, 112
        %v329 = vpop.permute.xlu0 %328
        %s332 = scalar_lea.vmem %s221, 16 [#allocation7]
        %333 = vst.msk [vmem:[%s332] sm:$0xff] %vm321, %v327
        %334 = vst.msk [vmem:[%s332 + $0x8] sm:$0xff] %vm321, %v329
        %s335 = sand.u32 %s113, 1
        %s336 = scalar_lea.sflag [#allocation4], %s335
        %s337 = sand.u32 %s113, 1
        %s338 = smul.addr %s337, 32
        %s339 = scalar_lea.vmem [#allocation7], %s338
        // Predicated region
        $region41: #{tpu_custom_call.1} parent=31 // pred_check
          %p340 = pneg %p123
        $region42: #{tpu_custom_call.1} parent=31 // pred_check_branch
          %342 = sbr.rel (%p340) target = $region44
        $region43: #{tpu_custom_call.1} parent=31 // pred_region
          #allocation9 [shape = 'u32[6]{0}', space=smem, size = 0x18, scoped, tag = 'DMA stride descriptor']
          %s343 = smul.u32 2, %s26
          %s345 = ssub.s32 512, 512
          %346 = vsyncadd %s336, %s345
          %s347 = smul.addr %s25, 2
          %s348 = sadd.s32 %s343, %s347
          %s349 = smul.addr %s348, 128
          %s350 = scalar_lea.hbm %s3, %s349
          %s352 = sshll.u32 1, 14
          %s353 = sxor.u32 4294967295, %s352
          %s356 = sshll.u32 7, 18
          %s357 = sxor.u32 4294967295, %s356
          %s358 = sand.u32 0, %s357
          %s360 = sor.u32 %s358, 0
          %s362 = sshll.u32 3, 24
          %s363 = sxor.u32 4294967295, %s362
          %s364 = sand.u32 %s360, %s363
          %s366 = sor.u32 %s364, 0
          %s367 = sshll.u32 %s339, 4
          %s368 = int_to_ptr.vmem [resolvable:$true] %s367
          %374 = sst [smem:[#allocation9]] 256
          %s375 = scalar_lea.smem [#allocation9], 1
          %376 = sst [smem:[%s375]] 512
          %s377 = scalar_lea.smem [#allocation9], 2
          %378 = sst [smem:[%s377]] 2
          %s379 = scalar_lea.smem [#allocation9], 3
          %380 = sst [smem:[%s379]] 128
          %s381 = scalar_lea.smem [#allocation9], 4
          %382 = sst [smem:[%s381]] 128
          %s383 = scalar_lea.smem [#allocation9], 5
          %384 = sst [smem:[%s383]] 8
          %386 = dma.general %s368, 512, %s350, %s336, [#allocation8], [#allocation9], %s366, 0
        $region44: #{tpu_custom_call.1} parent=31 // pred_fallthru
          _
      $region32: #{tpu_custom_call.1} parent=5 // pred_fallthru
        _
      %p387 = scmp.le.s32.totalorder 2, %s16
      // Predicated region
      $region45: #{tpu_custom_call.1} parent=5 // pred_check
        %p388 = pneg %p387
      $region46: #{tpu_custom_call.1} parent=5 // pred_check_branch
        %390 = sbr.rel (%p388) target = $region48
      $region47: #{tpu_custom_call.1} parent=5 // pred_region
        %s391 = ssub.s32 %s16, 2
        // Predicated region
        $region49: #{tpu_custom_call.1} parent=47 // pred_check
          %p392 = pneg %p129
        $region50: #{tpu_custom_call.1} parent=47 // pred_check_branch
          %394 = sbr.rel (%p392) target = $region52
        $region51: #{tpu_custom_call.1} parent=47 // pred_region
          %s395 = sand.u32 %s114, 1
          %s396 = scalar_lea.sflag [#allocation4], %s395
          %s397 = sand.u32 %s114, 1
          %s398 = smul.addr %s397, 32
          %s399 = scalar_lea.vmem [#allocation7], %s398
          %400 = dma.done %s396, 512
        $region52: #{tpu_custom_call.1} parent=47 // pred_fallthru
          _
      $region48: #{tpu_custom_call.1} parent=5 // pred_fallthru
        _
    $region6: #{tpu_custom_call.1} parent=1 // loop_footer
      %s20 = sadd.s32 1, %s16
    $region7: #{tpu_custom_call.1} parent=1 // loop_footer_branch
      %15 = sbr.rel target = $region3
    $region8: #{tpu_custom_call.1} parent=1 // loop_exit
      _
    %401 = vsyncpa [#allocation3], 1
    %s402 = scalar_lea.sflag [#allocation3], 1
    %403 = vsyncpa %s402, 1
    %404 = vsyncpa [#allocation6], 1
    %405 = vsyncpa [#allocation4], 1
    %s406 = scalar_lea.sflag [#allocation4], 1
    %407 = vsyncpa %s406, 1

</llo_original>
